<compile_context>
chip_gen: v5e
topology: v5e:2x2
jax: 0.10.0
libtpu: 0.0.40
codegen_flags: <defaults>
</compile_context>

<pallas_src>
import functools

import jax
import jax.numpy as jnp
from jax.experimental import pallas as pl
from jax.experimental.pallas import tpu as pltpu


def _round_up(x, m):
    return (x + m - 1) // m * m


def _reorder_gates(w, axis=0):
    """PyTorch LSTM gate order [i, f, g, o] -> [i, f, o, g] (sigmoid gates contiguous)."""
    i, f, g, o = jnp.split(w, 4, axis=axis)
    return jnp.concatenate([i, f, o, g], axis=axis)


def pack_params(params):
    """One-time (model-load) parameter preprocessing + packing into a single f32 slab.

    Slab layout (rows, all 128 lanes wide):
      [0,       Vp)      emb_proj_aug : row v<V = embedding[v] @ W_ih_r^T ; row V = b_ih+b_hh
      [Vp,      Vp+H)    W_hh_r^T     : (H, 4H)
      [Vp+H,    Vp+2H)   W_fc^T       : (H, O) zero-padded to 128 lanes
      [Vp+2H,   Vp+2H+8) b_fc row     : lanes [0,O)=b_fc, rest -1e30 (kills padded softmax cols)
    """
    emb = params["embedding"].astype(jnp.float32)                      # (V, H)
    V, H = emb.shape
    O = params["b_fc"].shape[0]
    LN = _round_up(4 * H, 128)                                         # slab lane width

    w_ih_r = _reorder_gates(params["w_ih"].astype(jnp.float32))        # (4H, H)
    w_hh_rt = _reorder_gates(params["w_hh"].astype(jnp.float32)).T     # (H, 4H)
    bias = _reorder_gates((params["b_ih"] + params["b_hh"]).astype(jnp.float32))  # (4H,)

    # emb_proj[v] = emb[v] @ W_ih^T ; extra row V holds the fused LSTM bias.  A one-hot row
    # with an extra 1 in column V then yields emb[token] @ W_ih^T + b in a single MXU matmul.
    emb_proj = emb @ w_ih_r.T                                          # (V, 4H)
    Vp = _round_up(V + 1, 8)
    emb_blk = jnp.zeros((Vp, LN), jnp.float32)
    emb_blk = emb_blk.at[:V, : 4 * H].set(emb_proj)
    emb_blk = emb_blk.at[V, : 4 * H].set(bias)

    whh_blk = jnp.zeros((H, LN), jnp.float32).at[:, : 4 * H].set(w_hh_rt)
    wfc_blk = jnp.zeros((H, LN), jnp.float32).at[:, :O].set(
        params["w_fc"].astype(jnp.float32).T)

    bfc_blk = jnp.zeros((8, LN), jnp.float32)
    bfc_blk = bfc_blk.at[0].set(jnp.full((LN,), -1e30, jnp.float32))
    bfc_blk = bfc_blk.at[0, :O].set(params["b_fc"].astype(jnp.float32))

    packed = jnp.concatenate([emb_blk, whh_blk, wfc_blk, bfc_blk], axis=0)  # (Vp+2H+8, LN)

    meta = dict(V=V, H=H, O=O, Vp=Vp, LN=LN,
                off_emb=0, off_whh=Vp, off_wfc=Vp + H, off_bfc=Vp + 2 * H)
    return packed, meta


def _lstm_kernel(tok_ref, state_ref, p_ref, out_ref, *, T, Bp, meta):
    V, H, Vp = meta["V"], meta["H"], meta["Vp"]
    oe, ow, of, ob = meta["off_emb"], meta["off_whh"], meta["off_wfc"], meta["off_bfc"]
    TB = T * Bp

    # ---- prologue: fused embedding + input projection + LSTM biases (one MXU matmul) ----
    # NOTE: one-hot work is O(T*B*V); fine at V=16, switch to a pl.Element row-gather or a
    # manual DMA gather for vocab sizes beyond ~1-2K.
    tok = tok_ref[...]                                                  # (T*Bp, 1) int32
    lane = jax.lax.broadcasted_iota(jnp.int32, (TB, Vp), 1)
    one_hot = jnp.where((lane == tok) | (lane == V), 1.0, 0.0)          # col V = bias column
    x_proj = jnp.dot(one_hot, p_ref[oe:oe + Vp, :],
                     preferred_element_type=jnp.float32)                # (T*Bp, 4H)

    whh = p_ref[ow:ow + H, :]                                           # (H, 4H), VMEM resident
    h = state_ref[0:Bp, :]                                              # (Bp, H)
    c = state_ref[Bp:2 * Bp, :]                                         # (Bp, H)

    # ---- fully-unrolled recurrence (T small & static): one MXU push per step ----
    # TODO(synk): for larger H, hold whh in the MXU weight registers across all T steps via
    # pltpu.matmul_push_rhs / matmul_acc_lhs / matmul_pop; kept as jnp.dot here for lowering
    # robustness at this sub-MXU-tile operand size.  For T >> 16, switch to
    # lax.fori_loop(..., unroll=k) to bound vreg pressure.
    for t in range(T):
        xt = x_proj[t * Bp:(t + 1) * Bp, :]                             # static full-vreg slice
        gates = xt + jnp.dot(h, whh, preferred_element_type=jnp.float32)  # (Bp, 4H), order [i,f,o,g]
        sig = jax.nn.sigmoid(gates)                                     # full-slab EUP
        tnh = jnp.tanh(gates)                                           # full-slab EUP
        i_g = sig[:, 0 * H:1 * H]
        f_g = sig[:, 1 * H:2 * H]
        o_g = sig[:, 2 * H:3 * H]
        g_g = tnh[:, 3 * H:4 * H]
        c = f_g * c + i_g * g_g
        h = o_g * jnp.tanh(c)

    # ---- final Linear + LogSoftmax(dim=1); padded lanes carry bias -1e30 -> exp()==0 ----
    logits = jnp.dot(h, p_ref[of:of + H, :],
                     preferred_element_type=jnp.float32) + p_ref[ob:ob + 1, :]  # (Bp, 128)
    m = jnp.max(logits, axis=1, keepdims=True)
    z = logits - m
    lse = jnp.log(jnp.sum(jnp.exp(z), axis=1, keepdims=True))

    # single packed output slab: rows [0,Bp)=log-probs, [Bp,2Bp)=h_n, [2Bp,3Bp)=c_n
    out_ref[0:Bp, :] = z - lse
    out_ref[Bp:2 * Bp, 0:H] = h
    out_ref[2 * Bp:3 * Bp, 0:H] = c


def simple_lstm_forward(tokens, hidden, packed, *, meta):
    """tokens: (B, T) int32; hidden = (h0, c0), each (1, B, H); packed from pack_params()."""
    h0, c0 = hidden
    B, T = tokens.shape
    H, O, LN = meta["H"], meta["O"], meta["LN"]
    Bp = max(8, _round_up(B, 8))                    # pad batch to a full sublane tile

    # time-major, batch-padded token ids: row t*Bp + b holds tokens[b, t]
    tok_pad = jnp.zeros((Bp, T), jnp.int32).at[:B, :].set(tokens.astype(jnp.int32))
    tok_tm = tok_pad.T.reshape(T * Bp, 1)

    # packed initial state: rows [0,Bp) = h0 (padded), rows [Bp,2Bp) = c0 (padded)
    state = jnp.zeros((2 * Bp, H), jnp.float32)
    state = state.at[0:B, :].set(h0[0].astype(jnp.float32))
    state = state.at[Bp:Bp + B, :].set(c0[0].astype(jnp.float32))

    vmem = pl.BlockSpec(memory_space=pltpu.MemorySpace.VMEM)   # whole array, VMEM-resident
    kernel = functools.partial(_lstm_kernel, T=T, Bp=Bp, meta=meta)
    out = pl.pallas_call(
        kernel,
        out_shape=jax.ShapeDtypeStruct((3 * Bp, LN), jnp.float32),
        in_specs=[vmem, vmem, vmem],
        out_specs=vmem,
    )(tok_tm, state, packed)

    logp = out[0:B, 0:O]
    h_n = out[Bp:Bp + B, 0:H]
    c_n = out[2 * Bp:2 * Bp + B, 0:H]
    return logp, (h_n[None, :, :], c_n[None, :, :])


def ref_forward(tokens, hidden, params):
    """Pure-JAX reference matching torch semantics (PyTorch gate order i, f, g, o)."""
    h = hidden[0][0]
    c = hidden[1][0]
    x = params["embedding"][tokens]                                     # (B, T, H)
    T = x.shape[1]
    H = h.shape[-1]
    for t in range(T):
        gates = (x[:, t] @ params["w_ih"].T + h @ params["w_hh"].T
                 + params["b_ih"] + params["b_hh"])
        i_g = jax.nn.sigmoid(gates[:, 0 * H:1 * H])
        f_g = jax.nn.sigmoid(gates[:, 1 * H:2 * H])
        g_g = jnp.tanh(gates[:, 2 * H:3 * H])
        o_g = jax.nn.sigmoid(gates[:, 3 * H:4 * H])
        c = f_g * c + i_g * g_g
        h = o_g * jnp.tanh(c)
    logits = h @ params["w_fc"].T + params["b_fc"]
    return jax.nn.log_softmax(logits, axis=1), (h[None], c[None])


if __name__ == "__main__":
    # Small shapes implied by the module: vocab=16, hidden=32, output=16, B=2, T=8.
    V, H, O = 16, 32, 16
    B, T = 2, 8

    key = jax.random.PRNGKey(0)
    ks = jax.random.split(key, 8)
    s = 1.0 / jnp.sqrt(H)  # PyTorch-style uniform init scale
    params = {
        "embedding": jax.random.normal(ks[0], (V, H), jnp.float32),
        "w_ih": jax.random.uniform(ks[1], (4 * H, H), jnp.float32, -s, s),
        "w_hh": jax.random.uniform(ks[2], (4 * H, H), jnp.float32, -s, s),
        "b_ih": jax.random.uniform(ks[3], (4 * H,), jnp.float32, -s, s),
        "b_hh": jax.random.uniform(ks[4], (4 * H,), jnp.float32, -s, s),
        "w_fc": jax.random.uniform(ks[5], (O, H), jnp.float32, -s, s),
        "b_fc": jax.random.uniform(ks[6], (O,), jnp.float32, -s, s),
    }

    tokens = jax.random.randint(ks[7], (B, T), 0, V, jnp.int32)
    h0 = jnp.zeros((1, B, H), jnp.float32)   # initHidden (zeros), batch-expanded
    c0 = jnp.zeros((1, B, H), jnp.float32)

    # One-time parameter packing (model-load time), thin jitted per-call forward.
    packed, meta = pack_params(params)
    packed = jax.block_until_ready(packed)
    fwd = jax.jit(functools.partial(simple_lstm_forward, meta=meta))

    logp, (h_n, c_n) = fwd(tokens, (h0, c0), packed)
    jax.block_until_ready((logp, h_n, c_n))

    ref_logp, (ref_h, ref_c) = ref_forward(tokens, (h0, c0), params)
    assert jnp.allclose(logp, ref_logp, atol=1e-4, rtol=1e-4)
    assert jnp.allclose(h_n, ref_h, atol=1e-4, rtol=1e-4)
    assert jnp.allclose(c_n, ref_c, atol=1e-4, rtol=1e-4)

    print("KERNEL_OK")
</pallas_src>

<mosaic_0001>
module attributes {stable_mosaic.version = 11 : i64} {
  func.func @_lstm_kernel(%arg0: memref<64x1xi32, #tpu.memory_space<vmem>>, %arg1: memref<16x32xf32, #tpu.memory_space<vmem>>, %arg2: memref<96x128xf32, #tpu.memory_space<vmem>>, %arg3: memref<24x128xf32, #tpu.memory_space<vmem>>) attributes {dimension_semantics = [], scalar_prefetch = 0 : i64, scratch_operands = 0 : i64, tpu.core_type = #tpu.core_type<tc>} {
    %c0 = arith.constant 0 : index
    %c0_0 = arith.constant 0 : index
    %0 = vector.load %arg0[%c0, %c0_0] : memref<64x1xi32, #tpu.memory_space<vmem>>, vector<64x1xi32>
    %1 = tpu.iota {dimensions = array<i32: 1>} : vector<64x24xi32>
    %2 = vector.broadcast %0 : vector<64x1xi32> to vector<64x24xi32>
    %3 = arith.cmpi eq, %1, %2 : vector<64x24xi32>
    %c16_i32 = arith.constant 16 : i32
    %4 = vector.broadcast %c16_i32 : i32 to vector<64x24xi32>
    %5 = arith.cmpi eq, %1, %4 : vector<64x24xi32>
    %6 = arith.ori %3, %5 : vector<64x24xi1>
    %cst = arith.constant 1.000000e+00 : f32
    %cst_1 = arith.constant 0.000000e+00 : f32
    %7 = vector.broadcast %cst : f32 to vector<64x24xf32>
    %8 = vector.broadcast %cst_1 : f32 to vector<64x24xf32>
    %9 = arith.select %6, %7, %8 : vector<64x24xi1>, vector<64x24xf32>
    %c0_2 = arith.constant 0 : index
    %c0_3 = arith.constant 0 : index
    %10 = vector.load %arg2[%c0_2, %c0_3] : memref<96x128xf32, #tpu.memory_space<vmem>>, vector<24x128xf32>
    %cst_4 = arith.constant dense<0.000000e+00> : vector<64x128xf32>
    %11 = tpu.matmul %9, %10, %cst_4 {dimension_numbers = #tpu.dot_dimension_numbers<[1], [0], [0], [1], [0, 0, 1, 1], [], []>} : vector<64x24xf32>, vector<24x128xf32>, vector<64x128xf32> -> vector<64x128xf32>
    %c24 = arith.constant 24 : index
    %c0_5 = arith.constant 0 : index
    %12 = vector.load %arg2[%c24, %c0_5] : memref<96x128xf32, #tpu.memory_space<vmem>>, vector<32x128xf32>
    %c0_6 = arith.constant 0 : index
    %c0_7 = arith.constant 0 : index
    %13 = vector.load %arg1[%c0_6, %c0_7] : memref<16x32xf32, #tpu.memory_space<vmem>>, vector<8x32xf32>
    %c8 = arith.constant 8 : index
    %c0_8 = arith.constant 0 : index
    %14 = vector.load %arg1[%c8, %c0_8] : memref<16x32xf32, #tpu.memory_space<vmem>>, vector<8x32xf32>
    %15 = vector.extract_strided_slice %11 {offsets = [0, 0], sizes = [8, 128], strides = [1, 1]} : vector<64x128xf32> to vector<8x128xf32>
    %cst_9 = arith.constant dense<0.000000e+00> : vector<8x128xf32>
    %16 = tpu.matmul %13, %12, %cst_9 {dimension_numbers = #tpu.dot_dimension_numbers<[1], [0], [0], [1], [0, 0, 1, 1], [], []>} : vector<8x32xf32>, vector<32x128xf32>, vector<8x128xf32> -> vector<8x128xf32>
    %17 = arith.addf %15, %16 : vector<8x128xf32>
    %18 = arith.negf %17 : vector<8x128xf32>
    %19 = math.exp %18 : vector<8x128xf32>
    %cst_10 = arith.constant 1.000000e+00 : f32
    %20 = vector.broadcast %cst_10 : f32 to vector<8x128xf32>
    %21 = arith.addf %20, %19 : vector<8x128xf32>
    %22 = arith.divf %20, %21 : vector<8x128xf32>
    %23 = math.tanh %17 : vector<8x128xf32>
    %24 = vector.extract_strided_slice %22 {offsets = [0, 0], sizes = [8, 32], strides = [1, 1]} : vector<8x128xf32> to vector<8x32xf32>
    %25 = vector.extract_strided_slice %22 {offsets = [0, 32], sizes = [8, 32], strides = [1, 1]} : vector<8x128xf32> to vector<8x32xf32>
    %26 = vector.extract_strided_slice %22 {offsets = [0, 64], sizes = [8, 32], strides = [1, 1]} : vector<8x128xf32> to vector<8x32xf32>
    %27 = vector.extract_strided_slice %23 {offsets = [0, 96], sizes = [8, 32], strides = [1, 1]} : vector<8x128xf32> to vector<8x32xf32>
    %28 = arith.mulf %25, %14 : vector<8x32xf32>
    %29 = arith.mulf %24, %27 : vector<8x32xf32>
    %30 = arith.addf %28, %29 : vector<8x32xf32>
    %31 = math.tanh %30 : vector<8x32xf32>
    %32 = arith.mulf %26, %31 : vector<8x32xf32>
    %33 = vector.extract_strided_slice %11 {offsets = [8, 0], sizes = [8, 128], strides = [1, 1]} : vector<64x128xf32> to vector<8x128xf32>
    %cst_11 = arith.constant dense<0.000000e+00> : vector<8x128xf32>
    %34 = tpu.matmul %32, %12, %cst_11 {dimension_numbers = #tpu.dot_dimension_numbers<[1], [0], [0], [1], [0, 0, 1, 1], [], []>} : vector<8x32xf32>, vector<32x128xf32>, vector<8x128xf32> -> vector<8x128xf32>
    %35 = arith.addf %33, %34 : vector<8x128xf32>
    %36 = arith.negf %35 : vector<8x128xf32>
    %37 = math.exp %36 : vector<8x128xf32>
    %cst_12 = arith.constant 1.000000e+00 : f32
    %38 = vector.broadcast %cst_12 : f32 to vector<8x128xf32>
    %39 = arith.addf %38, %37 : vector<8x128xf32>
    %40 = arith.divf %38, %39 : vector<8x128xf32>
    %41 = math.tanh %35 : vector<8x128xf32>
    %42 = vector.extract_strided_slice %40 {offsets = [0, 0], sizes = [8, 32], strides = [1, 1]} : vector<8x128xf32> to vector<8x32xf32>
    %43 = vector.extract_strided_slice %40 {offsets = [0, 32], sizes = [8, 32], strides = [1, 1]} : vector<8x128xf32> to vector<8x32xf32>
    %44 = vector.extract_strided_slice %40 {offsets = [0, 64], sizes = [8, 32], strides = [1, 1]} : vector<8x128xf32> to vector<8x32xf32>
    %45 = vector.extract_strided_slice %41 {offsets = [0, 96], sizes = [8, 32], strides = [1, 1]} : vector<8x128xf32> to vector<8x32xf32>
    %46 = arith.mulf %43, %30 : vector<8x32xf32>
    %47 = arith.mulf %42, %45 : vector<8x32xf32>
    %48 = arith.addf %46, %47 : vector<8x32xf32>
    %49 = math.tanh %48 : vector<8x32xf32>
    %50 = arith.mulf %44, %49 : vector<8x32xf32>
    %51 = vector.extract_strided_slice %11 {offsets = [16, 0], sizes = [8, 128], strides = [1, 1]} : vector<64x128xf32> to vector<8x128xf32>
    %cst_13 = arith.constant dense<0.000000e+00> : vector<8x128xf32>
    %52 = tpu.matmul %50, %12, %cst_13 {dimension_numbers = #tpu.dot_dimension_numbers<[1], [0], [0], [1], [0, 0, 1, 1], [], []>} : vector<8x32xf32>, vector<32x128xf32>, vector<8x128xf32> -> vector<8x128xf32>
    %53 = arith.addf %51, %52 : vector<8x128xf32>
    %54 = arith.negf %53 : vector<8x128xf32>
    %55 = math.exp %54 : vector<8x128xf32>
    %cst_14 = arith.constant 1.000000e+00 : f32
    %56 = vector.broadcast %cst_14 : f32 to vector<8x128xf32>
    %57 = arith.addf %56, %55 : vector<8x128xf32>
    %58 = arith.divf %56, %57 : vector<8x128xf32>
    %59 = math.tanh %53 : vector<8x128xf32>
    %60 = vector.extract_strided_slice %58 {offsets = [0, 0], sizes = [8, 32], strides = [1, 1]} : vector<8x128xf32> to vector<8x32xf32>
    %61 = vector.extract_strided_slice %58 {offsets = [0, 32], sizes = [8, 32], strides = [1, 1]} : vector<8x128xf32> to vector<8x32xf32>
    %62 = vector.extract_strided_slice %58 {offsets = [0, 64], sizes = [8, 32], strides = [1, 1]} : vector<8x128xf32> to vector<8x32xf32>
    %63 = vector.extract_strided_slice %59 {offsets = [0, 96], sizes = [8, 32], strides = [1, 1]} : vector<8x128xf32> to vector<8x32xf32>
    %64 = arith.mulf %61, %48 : vector<8x32xf32>
    %65 = arith.mulf %60, %63 : vector<8x32xf32>
    %66 = arith.addf %64, %65 : vector<8x32xf32>
    %67 = math.tanh %66 : vector<8x32xf32>
    %68 = arith.mulf %62, %67 : vector<8x32xf32>
    %69 = vector.extract_strided_slice %11 {offsets = [24, 0], sizes = [8, 128], strides = [1, 1]} : vector<64x128xf32> to vector<8x128xf32>
    %cst_15 = arith.constant dense<0.000000e+00> : vector<8x128xf32>
    %70 = tpu.matmul %68, %12, %cst_15 {dimension_numbers = #tpu.dot_dimension_numbers<[1], [0], [0], [1], [0, 0, 1, 1], [], []>} : vector<8x32xf32>, vector<32x128xf32>, vector<8x128xf32> -> vector<8x128xf32>
    %71 = arith.addf %69, %70 : vector<8x128xf32>
    %72 = arith.negf %71 : vector<8x128xf32>
    %73 = math.exp %72 : vector<8x128xf32>
    %cst_16 = arith.constant 1.000000e+00 : f32
    %74 = vector.broadcast %cst_16 : f32 to vector<8x128xf32>
    %75 = arith.addf %74, %73 : vector<8x128xf32>
    %76 = arith.divf %74, %75 : vector<8x128xf32>
    %77 = math.tanh %71 : vector<8x128xf32>
    %78 = vector.extract_strided_slice %76 {offsets = [0, 0], sizes = [8, 32], strides = [1, 1]} : vector<8x128xf32> to vector<8x32xf32>
    %79 = vector.extract_strided_slice %76 {offsets = [0, 32], sizes = [8, 32], strides = [1, 1]} : vector<8x128xf32> to vector<8x32xf32>
    %80 = vector.extract_strided_slice %76 {offsets = [0, 64], sizes = [8, 32], strides = [1, 1]} : vector<8x128xf32> to vector<8x32xf32>
    %81 = vector.extract_strided_slice %77 {offsets = [0, 96], sizes = [8, 32], strides = [1, 1]} : vector<8x128xf32> to vector<8x32xf32>
    %82 = arith.mulf %79, %66 : vector<8x32xf32>
    %83 = arith.mulf %78, %81 : vector<8x32xf32>
    %84 = arith.addf %82, %83 : vector<8x32xf32>
    %85 = math.tanh %84 : vector<8x32xf32>
    %86 = arith.mulf %80, %85 : vector<8x32xf32>
    %87 = vector.extract_strided_slice %11 {offsets = [32, 0], sizes = [8, 128], strides = [1, 1]} : vector<64x128xf32> to vector<8x128xf32>
    %cst_17 = arith.constant dense<0.000000e+00> : vector<8x128xf32>
    %88 = tpu.matmul %86, %12, %cst_17 {dimension_numbers = #tpu.dot_dimension_numbers<[1], [0], [0], [1], [0, 0, 1, 1], [], []>} : vector<8x32xf32>, vector<32x128xf32>, vector<8x128xf32> -> vector<8x128xf32>
    %89 = arith.addf %87, %88 : vector<8x128xf32>
    %90 = arith.negf %89 : vector<8x128xf32>
    %91 = math.exp %90 : vector<8x128xf32>
    %cst_18 = arith.constant 1.000000e+00 : f32
    %92 = vector.broadcast %cst_18 : f32 to vector<8x128xf32>
    %93 = arith.addf %92, %91 : vector<8x128xf32>
    %94 = arith.divf %92, %93 : vector<8x128xf32>
    %95 = math.tanh %89 : vector<8x128xf32>
    %96 = vector.extract_strided_slice %94 {offsets = [0, 0], sizes = [8, 32], strides = [1, 1]} : vector<8x128xf32> to vector<8x32xf32>
    %97 = vector.extract_strided_slice %94 {offsets = [0, 32], sizes = [8, 32], strides = [1, 1]} : vector<8x128xf32> to vector<8x32xf32>
    %98 = vector.extract_strided_slice %94 {offsets = [0, 64], sizes = [8, 32], strides = [1, 1]} : vector<8x128xf32> to vector<8x32xf32>
    %99 = vector.extract_strided_slice %95 {offsets = [0, 96], sizes = [8, 32], strides = [1, 1]} : vector<8x128xf32> to vector<8x32xf32>
    %100 = arith.mulf %97, %84 : vector<8x32xf32>
    %101 = arith.mulf %96, %99 : vector<8x32xf32>
    %102 = arith.addf %100, %101 : vector<8x32xf32>
    %103 = math.tanh %102 : vector<8x32xf32>
    %104 = arith.mulf %98, %103 : vector<8x32xf32>
    %105 = vector.extract_strided_slice %11 {offsets = [40, 0], sizes = [8, 128], strides = [1, 1]} : vector<64x128xf32> to vector<8x128xf32>
    %cst_19 = arith.constant dense<0.000000e+00> : vector<8x128xf32>
    %106 = tpu.matmul %104, %12, %cst_19 {dimension_numbers = #tpu.dot_dimension_numbers<[1], [0], [0], [1], [0, 0, 1, 1], [], []>} : vector<8x32xf32>, vector<32x128xf32>, vector<8x128xf32> -> vector<8x128xf32>
    %107 = arith.addf %105, %106 : vector<8x128xf32>
    %108 = arith.negf %107 : vector<8x128xf32>
    %109 = math.exp %108 : vector<8x128xf32>
    %cst_20 = arith.constant 1.000000e+00 : f32
    %110 = vector.broadcast %cst_20 : f32 to vector<8x128xf32>
    %111 = arith.addf %110, %109 : vector<8x128xf32>
    %112 = arith.divf %110, %111 : vector<8x128xf32>
    %113 = math.tanh %107 : vector<8x128xf32>
    %114 = vector.extract_strided_slice %112 {offsets = [0, 0], sizes = [8, 32], strides = [1, 1]} : vector<8x128xf32> to vector<8x32xf32>
    %115 = vector.extract_strided_slice %112 {offsets = [0, 32], sizes = [8, 32], strides = [1, 1]} : vector<8x128xf32> to vector<8x32xf32>
    %116 = vector.extract_strided_slice %112 {offsets = [0, 64], sizes = [8, 32], strides = [1, 1]} : vector<8x128xf32> to vector<8x32xf32>
    %117 = vector.extract_strided_slice %113 {offsets = [0, 96], sizes = [8, 32], strides = [1, 1]} : vector<8x128xf32> to vector<8x32xf32>
    %118 = arith.mulf %115, %102 : vector<8x32xf32>
    %119 = arith.mulf %114, %117 : vector<8x32xf32>
    %120 = arith.addf %118, %119 : vector<8x32xf32>
    %121 = math.tanh %120 : vector<8x32xf32>
    %122 = arith.mulf %116, %121 : vector<8x32xf32>
    %123 = vector.extract_strided_slice %11 {offsets = [48, 0], sizes = [8, 128], strides = [1, 1]} : vector<64x128xf32> to vector<8x128xf32>
    %cst_21 = arith.constant dense<0.000000e+00> : vector<8x128xf32>
    %124 = tpu.matmul %122, %12, %cst_21 {dimension_numbers = #tpu.dot_dimension_numbers<[1], [0], [0], [1], [0, 0, 1, 1], [], []>} : vector<8x32xf32>, vector<32x128xf32>, vector<8x128xf32> -> vector<8x128xf32>
    %125 = arith.addf %123, %124 : vector<8x128xf32>
    %126 = arith.negf %125 : vector<8x128xf32>
    %127 = math.exp %126 : vector<8x128xf32>
    %cst_22 = arith.constant 1.000000e+00 : f32
    %128 = vector.broadcast %cst_22 : f32 to vector<8x128xf32>
    %129 = arith.addf %128, %127 : vector<8x128xf32>
    %130 = arith.divf %128, %129 : vector<8x128xf32>
    %131 = math.tanh %125 : vector<8x128xf32>
    %132 = vector.extract_strided_slice %130 {offsets = [0, 0], sizes = [8, 32], strides = [1, 1]} : vector<8x128xf32> to vector<8x32xf32>
    %133 = vector.extract_strided_slice %130 {offsets = [0, 32], sizes = [8, 32], strides = [1, 1]} : vector<8x128xf32> to vector<8x32xf32>
    %134 = vector.extract_strided_slice %130 {offsets = [0, 64], sizes = [8, 32], strides = [1, 1]} : vector<8x128xf32> to vector<8x32xf32>
    %135 = vector.extract_strided_slice %131 {offsets = [0, 96], sizes = [8, 32], strides = [1, 1]} : vector<8x128xf32> to vector<8x32xf32>
    %136 = arith.mulf %133, %120 : vector<8x32xf32>
    %137 = arith.mulf %132, %135 : vector<8x32xf32>
    %138 = arith.addf %136, %137 : vector<8x32xf32>
    %139 = math.tanh %138 : vector<8x32xf32>
    %140 = arith.mulf %134, %139 : vector<8x32xf32>
    %141 = vector.extract_strided_slice %11 {offsets = [56, 0], sizes = [8, 128], strides = [1, 1]} : vector<64x128xf32> to vector<8x128xf32>
    %cst_23 = arith.constant dense<0.000000e+00> : vector<8x128xf32>
    %142 = tpu.matmul %140, %12, %cst_23 {dimension_numbers = #tpu.dot_dimension_numbers<[1], [0], [0], [1], [0, 0, 1, 1], [], []>} : vector<8x32xf32>, vector<32x128xf32>, vector<8x128xf32> -> vector<8x128xf32>
    %143 = arith.addf %141, %142 : vector<8x128xf32>
    %144 = arith.negf %143 : vector<8x128xf32>
    %145 = math.exp %144 : vector<8x128xf32>
    %cst_24 = arith.constant 1.000000e+00 : f32
    %146 = vector.broadcast %cst_24 : f32 to vector<8x128xf32>
    %147 = arith.addf %146, %145 : vector<8x128xf32>
    %148 = arith.divf %146, %147 : vector<8x128xf32>
    %149 = math.tanh %143 : vector<8x128xf32>
    %150 = vector.extract_strided_slice %148 {offsets = [0, 0], sizes = [8, 32], strides = [1, 1]} : vector<8x128xf32> to vector<8x32xf32>
    %151 = vector.extract_strided_slice %148 {offsets = [0, 32], sizes = [8, 32], strides = [1, 1]} : vector<8x128xf32> to vector<8x32xf32>
    %152 = vector.extract_strided_slice %148 {offsets = [0, 64], sizes = [8, 32], strides = [1, 1]} : vector<8x128xf32> to vector<8x32xf32>
    %153 = vector.extract_strided_slice %149 {offsets = [0, 96], sizes = [8, 32], strides = [1, 1]} : vector<8x128xf32> to vector<8x32xf32>
    %154 = arith.mulf %151, %138 : vector<8x32xf32>
    %155 = arith.mulf %150, %153 : vector<8x32xf32>
    %156 = arith.addf %154, %155 : vector<8x32xf32>
    %157 = math.tanh %156 : vector<8x32xf32>
    %158 = arith.mulf %152, %157 : vector<8x32xf32>
    %c56 = arith.constant 56 : index
    %c0_25 = arith.constant 0 : index
    %159 = vector.load %arg2[%c56, %c0_25] : memref<96x128xf32, #tpu.memory_space<vmem>>, vector<32x128xf32>
    %cst_26 = arith.constant dense<0.000000e+00> : vector<8x128xf32>
    %160 = tpu.matmul %158, %159, %cst_26 {dimension_numbers = #tpu.dot_dimension_numbers<[1], [0], [0], [1], [0, 0, 1, 1], [], []>} : vector<8x32xf32>, vector<32x128xf32>, vector<8x128xf32> -> vector<8x128xf32>
    %c88 = arith.constant 88 : index
    %c0_27 = arith.constant 0 : index
    %161 = vector.load %arg2[%c88, %c0_27] : memref<96x128xf32, #tpu.memory_space<vmem>>, vector<1x128xf32>
    %162 = vector.broadcast %161 : vector<1x128xf32> to vector<8x128xf32>
    %163 = arith.addf %160, %162 : vector<8x128xf32>
    %cst_28 = arith.constant dense<0xFF800000> : vector<8xf32>
    %164 = vector.multi_reduction <maximumf>, %163, %cst_28 [1] : vector<8x128xf32> to vector<8xf32>
    %165 = vector.shape_cast %164 : vector<8xf32> to vector<8x1xf32>
    %166 = vector.broadcast %165 : vector<8x1xf32> to vector<8x128xf32>
    %167 = arith.subf %163, %166 : vector<8x128xf32>
    %168 = math.exp %167 : vector<8x128xf32>
    %cst_29 = arith.constant dense<0.000000e+00> : vector<8xf32>
    %169 = vector.multi_reduction <add>, %168, %cst_29 [1] : vector<8x128xf32> to vector<8xf32>
    %170 = vector.shape_cast %169 : vector<8xf32> to vector<8x1xf32>
    %171 = math.log %170 : vector<8x1xf32>
    %172 = vector.broadcast %171 : vector<8x1xf32> to vector<8x128xf32>
    %173 = arith.subf %167, %172 : vector<8x128xf32>
    %c0_30 = arith.constant 0 : index
    %c0_31 = arith.constant 0 : index
    %174 = vector.load %arg3[%c0_30, %c0_31] : memref<24x128xf32, #tpu.memory_space<vmem>>, vector<8x128xf32>
    tpu.vector_store %arg3[%c0_30, %c0_31], %173 {strides = array<i32>} : memref<24x128xf32, #tpu.memory_space<vmem>>, vector<8x128xf32>,
    %c8_32 = arith.constant 8 : index
    %c0_33 = arith.constant 0 : index
    %175 = vector.load %arg3[%c8_32, %c0_33] : memref<24x128xf32, #tpu.memory_space<vmem>>, vector<8x32xf32>
    tpu.vector_store %arg3[%c8_32, %c0_33], %158 {strides = array<i32>} : memref<24x128xf32, #tpu.memory_space<vmem>>, vector<8x32xf32>,
    %c16 = arith.constant 16 : index
    %c0_34 = arith.constant 0 : index
    %176 = vector.load %arg3[%c16, %c0_34] : memref<24x128xf32, #tpu.memory_space<vmem>>, vector<8x32xf32>
    tpu.vector_store %arg3[%c16, %c0_34], %156 {strides = array<i32>} : memref<24x128xf32, #tpu.memory_space<vmem>>, vector<8x32xf32>,
    return
  }
}

</mosaic_0001>

<llo_original>
// kernel: simple_lstm_forward.1
$region0: #{simple_lstm_forward.1}
  #allocation0 [shape = 'u32[]', space=smem, size = 0x4, offset = 0x4, fixed_abs, tag = 'smem constant byte address 0x4 - core index']
  #allocation1 [shape = 'u32[72,128]{1,0:T(1,128)}', space=vmem, size = 0x9000, scoped, tag = 'internal scratch']
  %s0 = inlined_call_operand.vmem [shape: s32[64,1], index: 0, kind: input, shape index: {}]
  %s1 = inlined_call_operand.vmem [shape: f32[16,32], index: 1, kind: input, shape index: {}]
  %s2 = inlined_call_operand.hbm [shape: f32[96,128], index: 2, kind: input, shape index: {}]
  %s3 = inlined_call_operand.vmem [shape: f32[24,128], index: 3, kind: output, shape index: {}]
  %s4 = sld [smem:[#allocation0]]
  $region26: #{simple_lstm_forward.1} parent=0
    _
  %s6 = ssub.s32 1, %s4
  %s7 = scalar_select 0, %s6, %s4
  $region1: #{simple_lstm_forward.1} parent=0
    #allocation2 [shape = 'u8[49152]{0}', space=vmem, size = 0xc000, scoped, tag = 'input window, operand 2, single buffered']
    #allocation3 [shape = 's32[1]{0}', space=sflag, size = 0x4, scoped, tag = 'scoped memory for simple_lstm_forward.1']
    %8 = vsyncpa [#allocation3], 0
    // Predicated region
    $region2: #{simple_lstm_forward.1} parent=1 // pred_check
      _
    $region3: #{simple_lstm_forward.1} parent=1 // pred_check_branch
      %10 = sbr.rel (0) target = $region5
    $region4: #{simple_lstm_forward.1} parent=1 // pred_region
      _
    $region5: #{simple_lstm_forward.1} parent=1 // pred_fallthru
      _
    // Predicated region
    $region6: #{simple_lstm_forward.1} parent=1 // pred_check
      _
    $region7: #{simple_lstm_forward.1} parent=1 // pred_check_branch
      %12 = sbr.rel (0) target = $region9
    $region8: #{simple_lstm_forward.1} parent=1 // pred_region
      _
    $region9: #{simple_lstm_forward.1} parent=1 // pred_fallthru
      _
    // Predicated region
    $region10: #{simple_lstm_forward.1} parent=1 // pred_check
      _
    $region11: #{simple_lstm_forward.1} parent=1 // pred_check_branch
      %14 = sbr.rel (0) target = $region13
    $region12: #{simple_lstm_forward.1} parent=1 // pred_region
      %16 = vsyncadd [#allocation3], 0
      %s17 = sshll.u32 %s2, 4
      %s18 = int_to_ptr.hbm [resolvable:$true] %s17
      %s19 = sshll.u32 [#allocation2], 4
      %s20 = int_to_ptr.vmem [resolvable:$true] %s19
      %25 = dma.hbm_to_vmem [thread:$0]  %s18, 1536, %s20, [#allocation3], 128, 128, 8
    $region13: #{simple_lstm_forward.1} parent=1 // pred_fallthru
      _
    // Predicated region
    $region14: #{simple_lstm_forward.1} parent=1 // pred_check
      _
    $region15: #{simple_lstm_forward.1} parent=1 // pred_check_branch
      %27 = sbr.rel (0) target = $region17
    $region16: #{simple_lstm_forward.1} parent=1 // pred_region
      %29 = dma.done [#allocation3], 1536
    $region17: #{simple_lstm_forward.1} parent=1 // pred_fallthru
      _
    %v30 = vld [vmem:[%s0] sm:$0xff]
    %v31 = vld [vmem:[%s0 + $0x8] sm:$0xff]
    %v32 = vld [vmem:[%s0 + $0x10] sm:$0xff]
    %v33 = vld [vmem:[%s0 + $0x18] sm:$0xff]
    %v34 = vld [vmem:[%s0 + $0x20] sm:$0xff]
    %v35 = vld [vmem:[%s0 + $0x28] sm:$0xff]
    %v36 = vld [vmem:[%s0 + $0x30] sm:$0xff]
    %v37 = vld [vmem:[%s0 + $0x38] sm:$0xff]
    %v38 = vlaneseq
    %v39 = vand.u32 %v38, 127
    %40 = vset.pattern.permute.xlu0 0
    %41 = vperm.xlu0 %40, %v30
    %v42 = vpop.permute.xlu0 %41
    %43 = vset.pattern.permute.xlu0 0
    %44 = vperm.xlu0 %43, %v31
    %v45 = vpop.permute.xlu0 %44
    %46 = vset.pattern.permute.xlu0 0
    %47 = vperm.xlu0 %46, %v32
    %v48 = vpop.permute.xlu0 %47
    %49 = vset.pattern.permute.xlu0 0
    %50 = vperm.xlu0 %49, %v33
    %v51 = vpop.permute.xlu0 %50
    %52 = vset.pattern.permute.xlu0 0
    %53 = vperm.xlu0 %52, %v34
    %v54 = vpop.permute.xlu0 %53
    %55 = vset.pattern.permute.xlu0 0
    %56 = vperm.xlu0 %55, %v35
    %v57 = vpop.permute.xlu0 %56
    %58 = vset.pattern.permute.xlu0 0
    %59 = vperm.xlu0 %58, %v36
    %v60 = vpop.permute.xlu0 %59
    %61 = vset.pattern.permute.xlu0 0
    %62 = vperm.xlu0 %61, %v37
    %v63 = vpop.permute.xlu0 %62
    %vm64 = vcmp.eq.s32.totalorder %v39, %v42
    %vm65 = vcmp.eq.s32.totalorder %v39, %v45
    %vm66 = vcmp.eq.s32.totalorder %v39, %v48
    %vm67 = vcmp.eq.s32.totalorder %v39, %v51
    %vm68 = vcmp.eq.s32.totalorder %v39, %v54
    %vm69 = vcmp.eq.s32.totalorder %v39, %v57
    %vm70 = vcmp.eq.s32.totalorder %v39, %v60
    %vm71 = vcmp.eq.s32.totalorder %v39, %v63
    %vm72 = vcmp.eq.s32.totalorder %v39, 16
    %vm73 = vmor %vm64, %vm72
    %vm74 = vmor %vm65, %vm72
    %vm75 = vmor %vm66, %vm72
    %vm76 = vmor %vm67, %vm72
    %vm77 = vmor %vm68, %vm72
    %vm78 = vmor %vm69, %vm72
    %vm79 = vmor %vm70, %vm72
    %vm80 = vmor %vm71, %vm72
    %v81 = vsel %vm73, 1.0, 0.0
    %v82 = vsel %vm74, 1.0, 0.0
    %v83 = vsel %vm75, 1.0, 0.0
    %v84 = vsel %vm76, 1.0, 0.0
    %v85 = vsel %vm77, 1.0, 0.0
    %v86 = vsel %vm78, 1.0, 0.0
    %v87 = vsel %vm79, 1.0, 0.0
    %v88 = vsel %vm80, 1.0, 0.0
    %v89 = vld [vmem:[#allocation2] sm:$0xff]
    %v90 = vld [vmem:[#allocation2 + $0x8] sm:$0xff]
    %v91 = vld [vmem:[#allocation2 + $0x10] sm:$0xff]
    %vm92 = vcmask 195584
    %v94 = vsel %vm92, %v81, 0
    %v97 = vsel %vm92, %v82, 0
    %v100 = vsel %vm92, %v83, 0
    %v103 = vsel %vm92, %v84, 0
    %v106 = vsel %vm92, %v85, 0
    %v109 = vsel %vm92, %v86, 0
    %v112 = vsel %vm92, %v87, 0
    %v115 = vsel %vm92, %v88, 0
    %117 = vmatpush.msra.mxu0 0.0
    %118 = vmatpush.msra.mxu0 0.0
    %119 = vmatpush.msra.mxu0 0.0
    %120 = vmatpush.msra.mxu0 0.0
    %121 = vmatpush.msra.mxu0 0.0
    %122 = vmatpush.msra.mxu0 0.0
    %123 = vmatpush.msra.mxu0 0.0
    %124 = vmatpush.msra.mxu0 0.0
    %125 = vmatpush.msra.mxu0 0.0
    %126 = vmatpush.msra.mxu0 0.0
    %127 = vmatpush.msra.mxu0 0.0
    %128 = vmatpush.msra.mxu0 0.0
    %129 = vmatpush.msra.mxu0 0.0
    %130 = vmatpush.msra.mxu0 %v91
    %131 = vmatpush.msra.mxu0 %v90
    %132 = vmatpush.msra.mxu0 %v89
    %133 = vmatmul.f32.gmra.mxu0 %v94
    %v134 = vpop.f32.mrf.mxu0
    %v135 = vadd.f32 0.0, %v134
    %136 = vmatmul.f32.gmra.mxu0 %v97
    %v137 = vpop.f32.mrf.mxu0
    %v138 = vadd.f32 0.0, %v137
    %139 = vmatmul.f32.gmra.mxu0 %v100
    %v140 = vpop.f32.mrf.mxu0
    %v141 = vadd.f32 0.0, %v140
    %142 = vmatmul.f32.gmra.mxu0 %v103
    %v143 = vpop.f32.mrf.mxu0
    %v144 = vadd.f32 0.0, %v143
    %145 = vmatmul.f32.gmra.mxu0 %v106
    %v146 = vpop.f32.mrf.mxu0
    %v147 = vadd.f32 0.0, %v146
    %148 = vmatmul.f32.gmra.mxu0 %v109
    %v149 = vpop.f32.mrf.mxu0
    %v150 = vadd.f32 0.0, %v149
    %151 = vmatmul.f32.gmra.mxu0 %v112
    %v152 = vpop.f32.mrf.mxu0
    %v153 = vadd.f32 0.0, %v152
    %154 = vmatmul.f32.gmra.mxu0 %v115
    %v155 = vpop.f32.mrf.mxu0
    %v156 = vadd.f32 0.0, %v155
    %157 = vdwg.mxu0
    %v158 = vld [vmem:[#allocation2 + $0x18] sm:$0xff]
    %v159 = vld [vmem:[#allocation2 + $0x20] sm:$0xff]
    %v160 = vld [vmem:[#allocation2 + $0x28] sm:$0xff]
    %v161 = vld [vmem:[#allocation2 + $0x30] sm:$0xff]
    %v162 = vld [vmem:[%s1] sm:$0xff]
    %v163 = vld [vmem:[%s1 + $0x8] sm:$0xff]
    %vm164 = vcmask 261120
    %v166 = vsel %vm164, %v162, 0
    %168 = vmatpush.msra.mxu0 0.0
    %169 = vmatpush.msra.mxu0 0.0
    %170 = vmatpush.msra.mxu0 0.0
    %171 = vmatpush.msra.mxu0 0.0
    %172 = vmatpush.msra.mxu0 0.0
    %173 = vmatpush.msra.mxu0 0.0
    %174 = vmatpush.msra.mxu0 0.0
    %175 = vmatpush.msra.mxu0 0.0
    %176 = vmatpush.msra.mxu0 0.0
    %177 = vmatpush.msra.mxu0 0.0
    %178 = vmatpush.msra.mxu0 0.0
    %179 = vmatpush.msra.mxu0 0.0
    %180 = vmatpush.msra.mxu0 %v161
    %181 = vmatpush.msra.mxu0 %v160
    %182 = vmatpush.msra.mxu0 %v159
    %183 = vmatpush.msra.mxu0 %v158
    %184 = vmatmul.f32.gmra.mxu0 %v166
    %v185 = vpop.f32.mrf.mxu0
    %v186 = vadd.f32 0.0, %v185
    %187 = vdwg.mxu0
    %v188 = vadd.f32 %v135, %v186
    %v189 = vxor.u32 %v188, 2147483648
    %v190 = vmul.f32 %v189, 1.442695
    %v191 = vpow.pop %v190
    %v192 = vadd.f32 %v191, 1.0
    %v193 = vrcp.pop %v192
    %v194 = vmul.f32 %v192, %v193
    %v195 = vsub.f32 1.0, %v194
    %v196 = vmul.f32 %v193, %v195
    %v197 = vadd.f32 %v193, %v196
    %vm198 = vweird.f32 %v192
    %vm199 = vweird.f32 %v193
    %vm200 = vmor %vm198, %vm199
    %v201 = vsel %vm200, %v193, %v197
    %v202 = vand.u32 2147483647, %v192
    %vm203 = vcmp.eq.f32.partialorder %v202, 8.507059e+37
    %v204 = vand.u32 %v192, 2147483648
    %v205 = vor.u32 1.1754944e-38, %v204
    %v206 = vsel %vm203, %v205, %v201
    %v207 = vmul.f32 1.0, %v206
    %v208 = vtanh.pop %v188
    %210 = vrot.lane.b32.xlu0 %v163, 32
    %v211 = vpop.permute.xlu0 %210
    %v213 = vmul.f32 %v207, %v211
    %215 = vrot.lane.b32.xlu0 %v208, 32
    %v216 = vpop.permute.xlu0 %215
    %v218 = vmul.f32 %v207, %v216
    %220 = vrot.lane.b32.xlu0 %v218, 32
    %v221 = vpop.permute.xlu0 %220
    %v223 = vadd.f32 %v213, %v221
    %v224 = vtanh.pop %v223
    %226 = vrot.lane.b32.xlu0 %v224, 32
    %v227 = vpop.permute.xlu0 %226
    %v229 = vmul.f32 %v207, %v227
    %231 = vrot.lane.b32.xlu0 %v229, 64
    %v232 = vpop.permute.xlu0 %231
    %v233 = vsel %vm164, %v232, 0
    %235 = vmatpush.msra.mxu0 0.0
    %236 = vmatpush.msra.mxu0 0.0
    %237 = vmatpush.msra.mxu0 0.0
    %238 = vmatpush.msra.mxu0 0.0
    %239 = vmatpush.msra.mxu0 0.0
    %240 = vmatpush.msra.mxu0 0.0
    %241 = vmatpush.msra.mxu0 0.0
    %242 = vmatpush.msra.mxu0 0.0
    %243 = vmatpush.msra.mxu0 0.0
    %244 = vmatpush.msra.mxu0 0.0
    %245 = vmatpush.msra.mxu0 0.0
    %246 = vmatpush.msra.mxu0 0.0
    %247 = vmatpush.msra.mxu0 %v161
    %248 = vmatpush.msra.mxu0 %v160
    %249 = vmatpush.msra.mxu0 %v159
    %250 = vmatpush.msra.mxu0 %v158
    %251 = vmatmul.f32.gmra.mxu0 %v233
    %v252 = vpop.f32.mrf.mxu0
    %v253 = vadd.f32 0.0, %v252
    %254 = vdwg.mxu0
    %v255 = vadd.f32 %v138, %v253
    %v256 = vxor.u32 %v255, 2147483648
    %v257 = vmul.f32 %v256, 1.442695
    %v258 = vpow.pop %v257
    %v259 = vadd.f32 %v258, 1.0
    %v260 = vrcp.pop %v259
    %v261 = vmul.f32 %v259, %v260
    %v262 = vsub.f32 1.0, %v261
    %v263 = vmul.f32 %v260, %v262
    %v264 = vadd.f32 %v260, %v263
    %vm265 = vweird.f32 %v259
    %vm266 = vweird.f32 %v260
    %vm267 = vmor %vm265, %vm266
    %v268 = vsel %vm267, %v260, %v264
    %v269 = vand.u32 2147483647, %v259
    %vm270 = vcmp.eq.f32.partialorder %v269, 8.507059e+37
    %v271 = vand.u32 %v259, 2147483648
    %v272 = vor.u32 1.1754944e-38, %v271
    %v273 = vsel %vm270, %v272, %v268
    %v274 = vmul.f32 1.0, %v273
    %v275 = vtanh.pop %v255
    %v276 = vmul.f32 %v274, %v223
    %278 = vrot.lane.b32.xlu0 %v275, 32
    %v279 = vpop.permute.xlu0 %278
    %v281 = vmul.f32 %v274, %v279
    %283 = vrot.lane.b32.xlu0 %v281, 32
    %v284 = vpop.permute.xlu0 %283
    %v286 = vadd.f32 %v276, %v284
    %v287 = vtanh.pop %v286
    %289 = vrot.lane.b32.xlu0 %v287, 32
    %v290 = vpop.permute.xlu0 %289
    %v292 = vmul.f32 %v274, %v290
    %294 = vrot.lane.b32.xlu0 %v292, 64
    %v295 = vpop.permute.xlu0 %294
    %v296 = vsel %vm164, %v295, 0
    %298 = vmatpush.msra.mxu0 0.0
    %299 = vmatpush.msra.mxu0 0.0
    %300 = vmatpush.msra.mxu0 0.0
    %301 = vmatpush.msra.mxu0 0.0
    %302 = vmatpush.msra.mxu0 0.0
    %303 = vmatpush.msra.mxu0 0.0
    %304 = vmatpush.msra.mxu0 0.0
    %305 = vmatpush.msra.mxu0 0.0
    %306 = vmatpush.msra.mxu0 0.0
    %307 = vmatpush.msra.mxu0 0.0
    %308 = vmatpush.msra.mxu0 0.0
    %309 = vmatpush.msra.mxu0 0.0
    %310 = vmatpush.msra.mxu0 %v161
    %311 = vmatpush.msra.mxu0 %v160
    %312 = vmatpush.msra.mxu0 %v159
    %313 = vmatpush.msra.mxu0 %v158
    %314 = vmatmul.f32.gmra.mxu0 %v296
    %v315 = vpop.f32.mrf.mxu0
    %v316 = vadd.f32 0.0, %v315
    %317 = vdwg.mxu0
    %v318 = vadd.f32 %v141, %v316
    %v319 = vxor.u32 %v318, 2147483648
    %v320 = vmul.f32 %v319, 1.442695
    %v321 = vpow.pop %v320
    %v322 = vadd.f32 %v321, 1.0
    %v323 = vrcp.pop %v322
    %v324 = vmul.f32 %v322, %v323
    %v325 = vsub.f32 1.0, %v324
    %v326 = vmul.f32 %v323, %v325
    %v327 = vadd.f32 %v323, %v326
    %vm328 = vweird.f32 %v322
    %vm329 = vweird.f32 %v323
    %vm330 = vmor %vm328, %vm329
    %v331 = vsel %vm330, %v323, %v327
    %v332 = vand.u32 2147483647, %v322
    %vm333 = vcmp.eq.f32.partialorder %v332, 8.507059e+37
    %v334 = vand.u32 %v322, 2147483648
    %v335 = vor.u32 1.1754944e-38, %v334
    %v336 = vsel %vm333, %v335, %v331
    %v337 = vmul.f32 1.0, %v336
    %v338 = vtanh.pop %v318
    %v339 = vmul.f32 %v337, %v286
    %341 = vrot.lane.b32.xlu0 %v338, 32
    %v342 = vpop.permute.xlu0 %341
    %v344 = vmul.f32 %v337, %v342
    %346 = vrot.lane.b32.xlu0 %v344, 32
    %v347 = vpop.permute.xlu0 %346
    %v349 = vadd.f32 %v339, %v347
    %v350 = vtanh.pop %v349
    %352 = vrot.lane.b32.xlu0 %v350, 32
    %v353 = vpop.permute.xlu0 %352
    %v355 = vmul.f32 %v337, %v353
    %357 = vrot.lane.b32.xlu0 %v355, 64
    %v358 = vpop.permute.xlu0 %357
    %v359 = vsel %vm164, %v358, 0
    %361 = vmatpush.msra.mxu0 0.0
    %362 = vmatpush.msra.mxu0 0.0
    %363 = vmatpush.msra.mxu0 0.0
    %364 = vmatpush.msra.mxu0 0.0
    %365 = vmatpush.msra.mxu0 0.0
    %366 = vmatpush.msra.mxu0 0.0
    %367 = vmatpush.msra.mxu0 0.0
    %368 = vmatpush.msra.mxu0 0.0
    %369 = vmatpush.msra.mxu0 0.0
    %370 = vmatpush.msra.mxu0 0.0
    %371 = vmatpush.msra.mxu0 0.0
    %372 = vmatpush.msra.mxu0 0.0
    %373 = vmatpush.msra.mxu0 %v161
    %374 = vmatpush.msra.mxu0 %v160
    %375 = vmatpush.msra.mxu0 %v159
    %376 = vmatpush.msra.mxu0 %v158
    %377 = vmatmul.f32.gmra.mxu0 %v359
    %v378 = vpop.f32.mrf.mxu0
    %v379 = vadd.f32 0.0, %v378
    %380 = vdwg.mxu0
    %v381 = vadd.f32 %v144, %v379
    %v382 = vxor.u32 %v381, 2147483648
    %v383 = vmul.f32 %v382, 1.442695
    %v384 = vpow.pop %v383
    %v385 = vadd.f32 %v384, 1.0
    %v386 = vrcp.pop %v385
    %v387 = vmul.f32 %v385, %v386
    %v388 = vsub.f32 1.0, %v387
    %v389 = vmul.f32 %v386, %v388
    %v390 = vadd.f32 %v386, %v389
    %vm391 = vweird.f32 %v385
    %vm392 = vweird.f32 %v386
    %vm393 = vmor %vm391, %vm392
    %v394 = vsel %vm393, %v386, %v390
    %v395 = vand.u32 2147483647, %v385
    %vm396 = vcmp.eq.f32.partialorder %v395, 8.507059e+37
    %v397 = vand.u32 %v385, 2147483648
    %v398 = vor.u32 1.1754944e-38, %v397
    %v399 = vsel %vm396, %v398, %v394
    %v400 = vmul.f32 1.0, %v399
    %v401 = vtanh.pop %v381
    %v402 = vmul.f32 %v400, %v349
    %404 = vrot.lane.b32.xlu0 %v401, 32
    %v405 = vpop.permute.xlu0 %404
    %v407 = vmul.f32 %v400, %v405
    %409 = vrot.lane.b32.xlu0 %v407, 32
    %v410 = vpop.permute.xlu0 %409
    %v412 = vadd.f32 %v402, %v410
    %v413 = vtanh.pop %v412
    %415 = vrot.lane.b32.xlu0 %v413, 32
    %v416 = vpop.permute.xlu0 %415
    %v418 = vmul.f32 %v400, %v416
    %420 = vrot.lane.b32.xlu0 %v418, 64
    %v421 = vpop.permute.xlu0 %420
    %v422 = vsel %vm164, %v421, 0
    %424 = vmatpush.msra.mxu0 0.0
    %425 = vmatpush.msra.mxu0 0.0
    %426 = vmatpush.msra.mxu0 0.0
    %427 = vmatpush.msra.mxu0 0.0
    %428 = vmatpush.msra.mxu0 0.0
    %429 = vmatpush.msra.mxu0 0.0
    %430 = vmatpush.msra.mxu0 0.0
    %431 = vmatpush.msra.mxu0 0.0
    %432 = vmatpush.msra.mxu0 0.0
    %433 = vmatpush.msra.mxu0 0.0
    %434 = vmatpush.msra.mxu0 0.0
    %435 = vmatpush.msra.mxu0 0.0
    %436 = vmatpush.msra.mxu0 %v161
    %437 = vmatpush.msra.mxu0 %v160
    %438 = vmatpush.msra.mxu0 %v159
    %439 = vmatpush.msra.mxu0 %v158
    %440 = vmatmul.f32.gmra.mxu0 %v422
    %v441 = vpop.f32.mrf.mxu0
    %v442 = vadd.f32 0.0, %v441
    %443 = vdwg.mxu0
    %v444 = vadd.f32 %v147, %v442
    %v445 = vxor.u32 %v444, 2147483648
    %v446 = vmul.f32 %v445, 1.442695
    %v447 = vpow.pop %v446
    %v448 = vadd.f32 %v447, 1.0
    %v449 = vrcp.pop %v448
    %v450 = vmul.f32 %v448, %v449
    %v451 = vsub.f32 1.0, %v450
    %v452 = vmul.f32 %v449, %v451
    %v453 = vadd.f32 %v449, %v452
    %vm454 = vweird.f32 %v448
    %vm455 = vweird.f32 %v449
    %vm456 = vmor %vm454, %vm455
    %v457 = vsel %vm456, %v449, %v453
    %v458 = vand.u32 2147483647, %v448
    %vm459 = vcmp.eq.f32.partialorder %v458, 8.507059e+37
    %v460 = vand.u32 %v448, 2147483648
    %v461 = vor.u32 1.1754944e-38, %v460
    %v462 = vsel %vm459, %v461, %v457
    %v463 = vmul.f32 1.0, %v462
    %v464 = vtanh.pop %v444
    %v465 = vmul.f32 %v463, %v412
    %467 = vrot.lane.b32.xlu0 %v464, 32
    %v468 = vpop.permute.xlu0 %467
    %v470 = vmul.f32 %v463, %v468
    %472 = vrot.lane.b32.xlu0 %v470, 32
    %v473 = vpop.permute.xlu0 %472
    %v475 = vadd.f32 %v465, %v473
    %v476 = vtanh.pop %v475
    %478 = vrot.lane.b32.xlu0 %v476, 32
    %v479 = vpop.permute.xlu0 %478
    %v481 = vmul.f32 %v463, %v479
    %483 = vrot.lane.b32.xlu0 %v481, 64
    %v484 = vpop.permute.xlu0 %483
    %v485 = vsel %vm164, %v484, 0
    %487 = vmatpush.msra.mxu0 0.0
    %488 = vmatpush.msra.mxu0 0.0
    %489 = vmatpush.msra.mxu0 0.0
    %490 = vmatpush.msra.mxu0 0.0
    %491 = vmatpush.msra.mxu0 0.0
    %492 = vmatpush.msra.mxu0 0.0
    %493 = vmatpush.msra.mxu0 0.0
    %494 = vmatpush.msra.mxu0 0.0
    %495 = vmatpush.msra.mxu0 0.0
    %496 = vmatpush.msra.mxu0 0.0
    %497 = vmatpush.msra.mxu0 0.0
    %498 = vmatpush.msra.mxu0 0.0
    %499 = vmatpush.msra.mxu0 %v161
    %500 = vmatpush.msra.mxu0 %v160
    %501 = vmatpush.msra.mxu0 %v159
    %502 = vmatpush.msra.mxu0 %v158
    %503 = vmatmul.f32.gmra.mxu0 %v485
    %v504 = vpop.f32.mrf.mxu0
    %v505 = vadd.f32 0.0, %v504
    %506 = vdwg.mxu0
    %v507 = vadd.f32 %v150, %v505
    %v508 = vxor.u32 %v507, 2147483648
    %v509 = vmul.f32 %v508, 1.442695
    %v510 = vpow.pop %v509
    %v511 = vadd.f32 %v510, 1.0
    %v512 = vrcp.pop %v511
    %v513 = vmul.f32 %v511, %v512
    %v514 = vsub.f32 1.0, %v513
    %v515 = vmul.f32 %v512, %v514
    %v516 = vadd.f32 %v512, %v515
    %vm517 = vweird.f32 %v511
    %vm518 = vweird.f32 %v512
    %vm519 = vmor %vm517, %vm518
    %v520 = vsel %vm519, %v512, %v516
    %v521 = vand.u32 2147483647, %v511
    %vm522 = vcmp.eq.f32.partialorder %v521, 8.507059e+37
    %v523 = vand.u32 %v511, 2147483648
    %v524 = vor.u32 1.1754944e-38, %v523
    %v525 = vsel %vm522, %v524, %v520
    %v526 = vmul.f32 1.0, %v525
    %v527 = vtanh.pop %v507
    %v528 = vmul.f32 %v526, %v475
    %530 = vrot.lane.b32.xlu0 %v527, 32
    %v531 = vpop.permute.xlu0 %530
    %v533 = vmul.f32 %v526, %v531
    %535 = vrot.lane.b32.xlu0 %v533, 32
    %v536 = vpop.permute.xlu0 %535
    %v538 = vadd.f32 %v528, %v536
    %v539 = vtanh.pop %v538
    %541 = vrot.lane.b32.xlu0 %v539, 32
    %v542 = vpop.permute.xlu0 %541
    %v544 = vmul.f32 %v526, %v542
    %546 = vrot.lane.b32.xlu0 %v544, 64
    %v547 = vpop.permute.xlu0 %546
    %v548 = vsel %vm164, %v547, 0
    %550 = vmatpush.msra.mxu0 0.0
    %551 = vmatpush.msra.mxu0 0.0
    %552 = vmatpush.msra.mxu0 0.0
    %553 = vmatpush.msra.mxu0 0.0
    %554 = vmatpush.msra.mxu0 0.0
    %555 = vmatpush.msra.mxu0 0.0
    %556 = vmatpush.msra.mxu0 0.0
    %557 = vmatpush.msra.mxu0 0.0
    %558 = vmatpush.msra.mxu0 0.0
    %559 = vmatpush.msra.mxu0 0.0
    %560 = vmatpush.msra.mxu0 0.0
    %561 = vmatpush.msra.mxu0 0.0
    %562 = vmatpush.msra.mxu0 %v161
    %563 = vmatpush.msra.mxu0 %v160
    %564 = vmatpush.msra.mxu0 %v159
    %565 = vmatpush.msra.mxu0 %v158
    %566 = vmatmul.f32.gmra.mxu0 %v548
    %v567 = vpop.f32.mrf.mxu0
    %v568 = vadd.f32 0.0, %v567
    %569 = vdwg.mxu0
    %v570 = vadd.f32 %v153, %v568
    %v571 = vxor.u32 %v570, 2147483648
    %v572 = vmul.f32 %v571, 1.442695
    %v573 = vpow.pop %v572
    %v574 = vadd.f32 %v573, 1.0
    %v575 = vrcp.pop %v574
    %v576 = vmul.f32 %v574, %v575
    %v577 = vsub.f32 1.0, %v576
    %v578 = vmul.f32 %v575, %v577
    %v579 = vadd.f32 %v575, %v578
    %vm580 = vweird.f32 %v574
    %vm581 = vweird.f32 %v575
    %vm582 = vmor %vm580, %vm581
    %v583 = vsel %vm582, %v575, %v579
    %v584 = vand.u32 2147483647, %v574
    %vm585 = vcmp.eq.f32.partialorder %v584, 8.507059e+37
    %v586 = vand.u32 %v574, 2147483648
    %v587 = vor.u32 1.1754944e-38, %v586
    %v588 = vsel %vm585, %v587, %v583
    %v589 = vmul.f32 1.0, %v588
    %v590 = vtanh.pop %v570
    %v591 = vmul.f32 %v589, %v538
    %593 = vrot.lane.b32.xlu0 %v590, 32
    %v594 = vpop.permute.xlu0 %593
    %v596 = vmul.f32 %v589, %v594
    %598 = vrot.lane.b32.xlu0 %v596, 32
    %v599 = vpop.permute.xlu0 %598
    %v601 = vadd.f32 %v591, %v599
    %v602 = vtanh.pop %v601
    %604 = vrot.lane.b32.xlu0 %v602, 32
    %v605 = vpop.permute.xlu0 %604
    %v607 = vmul.f32 %v589, %v605
    %609 = vrot.lane.b32.xlu0 %v607, 64
    %v610 = vpop.permute.xlu0 %609
    %v611 = vsel %vm164, %v610, 0
    %613 = vmatpush.msra.mxu0 0.0
    %614 = vmatpush.msra.mxu0 0.0
    %615 = vmatpush.msra.mxu0 0.0
    %616 = vmatpush.msra.mxu0 0.0
    %617 = vmatpush.msra.mxu0 0.0
    %618 = vmatpush.msra.mxu0 0.0
    %619 = vmatpush.msra.mxu0 0.0
    %620 = vmatpush.msra.mxu0 0.0
    %621 = vmatpush.msra.mxu0 0.0
    %622 = vmatpush.msra.mxu0 0.0
    %623 = vmatpush.msra.mxu0 0.0
    %624 = vmatpush.msra.mxu0 0.0
    %625 = vmatpush.msra.mxu0 %v161
    %626 = vmatpush.msra.mxu0 %v160
    %627 = vmatpush.msra.mxu0 %v159
    %628 = vmatpush.msra.mxu0 %v158
    %629 = vmatmul.f32.gmra.mxu0 %v611
    %v630 = vpop.f32.mrf.mxu0
    %v631 = vadd.f32 0.0, %v630
    %632 = vdwg.mxu0
    %v633 = vadd.f32 %v156, %v631
    %v634 = vxor.u32 %v633, 2147483648
    %v635 = vmul.f32 %v634, 1.442695
    %v636 = vpow.pop %v635
    %v637 = vadd.f32 %v636, 1.0
    %v638 = vrcp.pop %v637
    %v639 = vmul.f32 %v637, %v638
    %v640 = vsub.f32 1.0, %v639
    %v641 = vmul.f32 %v638, %v640
    %v642 = vadd.f32 %v638, %v641
    %vm643 = vweird.f32 %v637
    %vm644 = vweird.f32 %v638
    %vm645 = vmor %vm643, %vm644
    %v646 = vsel %vm645, %v638, %v642
    %v647 = vand.u32 2147483647, %v637
    %vm648 = vcmp.eq.f32.partialorder %v647, 8.507059e+37
    %v649 = vand.u32 %v637, 2147483648
    %v650 = vor.u32 1.1754944e-38, %v649
    %v651 = vsel %vm648, %v650, %v646
    %v652 = vmul.f32 1.0, %v651
    %v653 = vtanh.pop %v633
    %v654 = vmul.f32 %v652, %v601
    %656 = vrot.lane.b32.xlu0 %v653, 32
    %v657 = vpop.permute.xlu0 %656
    %v659 = vmul.f32 %v652, %v657
    %661 = vrot.lane.b32.xlu0 %v659, 32
    %v662 = vpop.permute.xlu0 %661
    %v664 = vadd.f32 %v654, %v662
    %v665 = vtanh.pop %v664
    %667 = vrot.lane.b32.xlu0 %v665, 32
    %v668 = vpop.permute.xlu0 %667
    %v670 = vmul.f32 %v652, %v668
    %v671 = vld [vmem:[#allocation2 + $0x38] sm:$0xff]
    %v672 = vld [vmem:[#allocation2 + $0x40] sm:$0xff]
    %v673 = vld [vmem:[#allocation2 + $0x48] sm:$0xff]
    %v674 = vld [vmem:[#allocation2 + $0x50] sm:$0xff]
    %v675 = vld [vmem:[#allocation2 + $0x58] sm:$0x1]
    %v676 = vperm.slane %v675, 0
    %678 = vrot.lane.b32.xlu0 %v670, 64
    %v679 = vpop.permute.xlu0 %678
    %v680 = vsel %vm164, %v679, 0
    %682 = vmatpush.msra.mxu0 0.0
    %683 = vmatpush.msra.mxu0 0.0
    %684 = vmatpush.msra.mxu0 0.0
    %685 = vmatpush.msra.mxu0 0.0
    %686 = vmatpush.msra.mxu0 0.0
    %687 = vmatpush.msra.mxu0 0.0
    %688 = vmatpush.msra.mxu0 0.0
    %689 = vmatpush.msra.mxu0 0.0
    %690 = vmatpush.msra.mxu0 0.0
    %691 = vmatpush.msra.mxu0 0.0
    %692 = vmatpush.msra.mxu0 0.0
    %693 = vmatpush.msra.mxu0 0.0
    %694 = vmatpush.msra.mxu0 %v674
    %695 = vmatpush.msra.mxu0 %v673
    %696 = vmatpush.msra.mxu0 %v672
    %697 = vmatpush.msra.mxu0 %v671
    %698 = vmatmul.f32.gmra.mxu0 %v680
    %v699 = vpop.f32.mrf.mxu0
    %v700 = vadd.f32 %v676, %v699
    %701 = vdwg.mxu0
    %702 = vmax.xlane.f32.xlu0 %v700
    %v703 = vpop.xlane.xlu0 %702
    %v704 = vsub.f32 %v700, %v703
    %v705 = vmul.f32 %v704, 1.442695
    %v706 = vpow.pop %v705
    %707 = vadd.xlane.f32.xlu0 %v706
    %v708 = vpop.xlane.xlu0 %707
    %v709 = vlog2.pop %v708
    %v710 = vmul.f32 %v709, 0.6931472
    %v711 = vsub.f32 %v704, %v710
    %712 = vst [vmem:[%s3] sm:$0xff] %v711
    %714 = vst.msk [vmem:[%s3 + $0x8] sm:$0xff] %vm164, %v679
    %716 = vrot.lane.b32.xlu0 %v664, 96
    %v717 = vpop.permute.xlu0 %716
    %719 = vst.msk [vmem:[%s3 + $0x10] sm:$0xff] %vm164, %v717
    // Predicated region
    $region18: #{simple_lstm_forward.1} parent=1 // pred_check
      _
    $region19: #{simple_lstm_forward.1} parent=1 // pred_check_branch
      %721 = sbr.rel (0) target = $region21
    $region20: #{simple_lstm_forward.1} parent=1 // pred_region
      _
    $region21: #{simple_lstm_forward.1} parent=1 // pred_fallthru
      _
    // Predicated region
    $region22: #{simple_lstm_forward.1} parent=1 // pred_check
      _
    $region23: #{simple_lstm_forward.1} parent=1 // pred_check_branch
      %723 = sbr.rel (0) target = $region25
    $region24: #{simple_lstm_forward.1} parent=1 // pred_region
      _
    $region25: #{simple_lstm_forward.1} parent=1 // pred_fallthru
      _
    %724 = vsyncpa [#allocation3], 1

</llo_original>
